<compile_context>
chip_gen: v6e
topology: v6e:2x2x1
jax: 0.10.0
libtpu: 0.0.40
codegen_flags: <defaults>
</compile_context>

<pallas_src>
import functools
import math

import jax
import jax.numpy as jnp
from jax.experimental import pallas as pl
from jax.experimental.pallas import tpu as pltpu


# ---------------------------------------------------------------------------
# LayerNormalization (torch-style: unbiased std, eps added to std)
# ---------------------------------------------------------------------------
def _layernorm_kernel(x_ref, a_ref, b_ref, o_ref, *, eps, feat):
    x = x_ref[...].astype(jnp.float32)                       # (TR, D)
    mean = jnp.mean(x, axis=-1, keepdims=True)
    xc = x - mean
    var = jnp.sum(xc * xc, axis=-1, keepdims=True) * (1.0 / (feat - 1))
    std = jnp.sqrt(var)
    y = xc / (std + eps)
    o_ref[...] = (a_ref[...].astype(jnp.float32) * y
                  + b_ref[...].astype(jnp.float32)).astype(o_ref.dtype)


def layernorm_pallas(x2d, alpha, bias, eps=1e-6, tr=256):
    R, D = x2d.shape
    tr = tr if R % tr == 0 else R                            # full rows if small
    kernel = functools.partial(_layernorm_kernel, eps=eps, feat=D)
    return pl.pallas_call(
        kernel,
        out_shape=jax.ShapeDtypeStruct((R, D), x2d.dtype),
        grid_spec=pltpu.PrefetchScalarGridSpec(
            num_scalar_prefetch=0,
            grid=(R // tr,),
            in_specs=[
                pl.BlockSpec((tr, D), lambda i: (i, 0)),
                pl.BlockSpec((1, D), lambda i: (0, 0)),
                pl.BlockSpec((1, D), lambda i: (0, 0)),
            ],
            out_specs=pl.BlockSpec((tr, D), lambda i: (i, 0)),
        ),
        compiler_params=pltpu.CompilerParams(
            dimension_semantics=("parallel",)),
    )(x2d, alpha.reshape(1, D), bias.reshape(1, D))


# ---------------------------------------------------------------------------
# Tiled linear: out = [relu](x @ w + b) [+ residual], f32 accumulation
# ---------------------------------------------------------------------------
def _linear_kernel(*refs, has_bias, has_residual, apply_relu):
    x_ref, w_ref = refs[0], refs[1]
    pos = 2
    b_ref = refs[pos] if has_bias else None
    pos += 1 if has_bias else 0
    r_ref = refs[pos] if has_residual else None
    pos += 1 if has_residual else 0
    o_ref, acc_ref = refs[pos], refs[pos + 1]

    @pl.when(pl.program_id(2) == 0)
    def _init():
        acc_ref[...] = jnp.zeros_like(acc_ref)

    acc_ref[...] += jnp.dot(x_ref[...], w_ref[...],
                            preferred_element_type=jnp.float32)

    @pl.when(pl.program_id(2) == pl.num_programs(2) - 1)
    def _finalize():
        out = acc_ref[...]
        if has_bias:
            out = out + b_ref[...].astype(jnp.float32)
        if apply_relu:
            out = jnp.maximum(out, 0.0)
        if has_residual:
            out = out + r_ref[...].astype(jnp.float32)
        o_ref[...] = out.astype(o_ref.dtype)


def linear_pallas(x, w, b=None, residual=None, apply_relu=False,
                  tm=256, tn=256, tk=512):
    M, K = x.shape
    _, N = w.shape
    tm = tm if M % tm == 0 else M
    tn = tn if N % tn == 0 else N
    tk = tk if K % tk == 0 else K
    has_bias = b is not None
    has_residual = residual is not None

    in_specs = [
        pl.BlockSpec((tm, tk), lambda i, j, k: (i, k)),
        pl.BlockSpec((tk, tn), lambda i, j, k: (k, j)),
    ]
    inputs = [x, w]
    if has_bias:
        in_specs.append(pl.BlockSpec((1, tn), lambda i, j, k: (0, j)))
        inputs.append(b.reshape(1, N))
    if has_residual:
        in_specs.append(pl.BlockSpec((tm, tn), lambda i, j, k: (i, j)))
        inputs.append(residual)

    kernel = functools.partial(_linear_kernel, has_bias=has_bias,
                               has_residual=has_residual, apply_relu=apply_relu)
    return pl.pallas_call(
        kernel,
        out_shape=jax.ShapeDtypeStruct((M, N), x.dtype),
        grid_spec=pltpu.PrefetchScalarGridSpec(
            num_scalar_prefetch=0,
            grid=(M // tm, N // tn, K // tk),
            in_specs=in_specs,
            out_specs=pl.BlockSpec((tm, tn), lambda i, j, k: (i, j)),
            scratch_shapes=[pltpu.VMEM((tm, tn), jnp.float32)],
        ),
        compiler_params=pltpu.CompilerParams(
            dimension_semantics=("parallel", "parallel", "arbitrary")),
    )(*inputs)


# ---------------------------------------------------------------------------
# Scaled-dot-product attention (per batch, per head)
# ---------------------------------------------------------------------------
def _attention_kernel(q_ref, k_ref, v_ref, m_ref, o_ref, *, scale):
    q = q_ref[...].astype(jnp.float32)                       # (Sq, dk)
    k = k_ref[...].astype(jnp.float32)                       # (Sk, dk)
    v = v_ref[...].astype(jnp.float32)                       # (Sk, dk)
    s = jnp.dot(q, k.T, preferred_element_type=jnp.float32) * scale
    s = jnp.where(m_ref[...] == 0, jnp.float32(-1e9), s)     # masked_fill
    s = s - jnp.max(s, axis=-1, keepdims=True)
    p = jnp.exp(s)
    p = p / jnp.sum(p, axis=-1, keepdims=True)
    o_ref[...] = jnp.dot(p, v,
                         preferred_element_type=jnp.float32).astype(o_ref.dtype)


def attention_pallas(q, k, v, mask):
    """q,k,v: (B, H, S, dk); mask: (B, 1, Sq, Sk). Returns (B, H, Sq, dk)."""
    B, H, Sq, dk = q.shape
    Sk = k.shape[2]
    kernel = functools.partial(_attention_kernel, scale=1.0 / math.sqrt(dk))
    return pl.pallas_call(
        kernel,
        out_shape=jax.ShapeDtypeStruct((B, H, Sq, dk), q.dtype),
        grid_spec=pltpu.PrefetchScalarGridSpec(
            num_scalar_prefetch=0,
            grid=(B, H),
            in_specs=[
                pl.BlockSpec((None, None, Sq, dk), lambda b, h: (b, h, 0, 0)),
                pl.BlockSpec((None, None, Sk, dk), lambda b, h: (b, h, 0, 0)),
                pl.BlockSpec((None, None, Sk, dk), lambda b, h: (b, h, 0, 0)),
                pl.BlockSpec((None, None, Sq, Sk), lambda b, h: (b, 0, 0, 0)),
            ],
            out_specs=pl.BlockSpec((None, None, Sq, dk),
                                   lambda b, h: (b, h, 0, 0)),
        ),
        compiler_params=pltpu.CompilerParams(
            dimension_semantics=("parallel", "parallel")),
    )(q, k, v, mask)


# ---------------------------------------------------------------------------
# MultiHeadAttentionBlock (projections + attention; w_o is fused by caller)
# ---------------------------------------------------------------------------
def multi_head_attention_forward(q_in, k_in, v_in, mask, p, h):
    B, Sq, D = q_in.shape
    Sk = k_in.shape[1]
    dk = D // h
    q = linear_pallas(q_in.reshape(B * Sq, D), p["w_q"])
    k = linear_pallas(k_in.reshape(B * Sk, D), p["w_k"])
    v = linear_pallas(v_in.reshape(B * Sk, D), p["w_v"])
    q = q.reshape(B, Sq, h, dk).transpose(0, 2, 1, 3)
    k = k.reshape(B, Sk, h, dk).transpose(0, 2, 1, 3)
    v = v.reshape(B, Sk, h, dk).transpose(0, 2, 1, 3)
    ctx = attention_pallas(q, k, v, mask)                    # (B, h, Sq, dk)
    return ctx.transpose(0, 2, 1, 3).reshape(B * Sq, D)      # concat heads


# ---------------------------------------------------------------------------
# DecoderBlock forward
# ---------------------------------------------------------------------------
def decoder_block_forward(x, encoder_output, src_mask, tgt_mask, params, h):
    B, S, D = x.shape
    x2 = x.reshape(B * S, D)

    # residual 1: masked self-attention (w_o fused with residual add)
    xn = layernorm_pallas(x2, params["ln"][0]["alpha"],
                          params["ln"][0]["bias"]).reshape(B, S, D)
    ctx = multi_head_attention_forward(xn, xn, xn, tgt_mask,
                                       params["self_attn"], h)
    x2 = linear_pallas(ctx, params["self_attn"]["w_o"], residual=x2)

    # residual 2: cross-attention on encoder output
    xn = layernorm_pallas(x2, params["ln"][1]["alpha"],
                          params["ln"][1]["bias"]).reshape(B, S, D)
    ctx = multi_head_attention_forward(xn, encoder_output, encoder_output,
                                       src_mask, params["cross_attn"], h)
    x2 = linear_pallas(ctx, params["cross_attn"]["w_o"], residual=x2)

    # residual 3: feed-forward (Linear -> ReLU -> Linear, residual fused)
    xn = layernorm_pallas(x2, params["ln"][2]["alpha"], params["ln"][2]["bias"])
    hdn = linear_pallas(xn, params["ffn"]["w1"], b=params["ffn"]["b1"],
                        apply_relu=True)
    x2 = linear_pallas(hdn, params["ffn"]["w2"], b=params["ffn"]["b2"],
                       residual=x2)

    return x2.reshape(B, S, D)


# ---------------------------------------------------------------------------
# Pure-JAX reference (mirrors the PyTorch module, eval mode)
# ---------------------------------------------------------------------------
def _reference_decoder_block(x, enc, src_mask, tgt_mask, params, h, eps=1e-6):
    def ln(t, a, b):
        mean = t.mean(-1, keepdims=True)
        tc = t - mean
        std = jnp.sqrt((tc * tc).sum(-1, keepdims=True) / (t.shape[-1] - 1))
        return a * (tc / (std + eps)) + b

    def mha(q_in, k_in, v_in, mask, p):
        B, Sq, D = q_in.shape
        Sk = k_in.shape[1]
        dk = D // h
        q = (q_in @ p["w_q"]).reshape(B, Sq, h, dk).transpose(0, 2, 1, 3)
        k = (k_in @ p["w_k"]).reshape(B, Sk, h, dk).transpose(0, 2, 1, 3)
        v = (v_in @ p["w_v"]).reshape(B, Sk, h, dk).transpose(0, 2, 1, 3)
        s = q @ jnp.swapaxes(k, -1, -2) / math.sqrt(dk)
        s = jnp.where(mask == 0, -1e9, s)
        a = jax.nn.softmax(s, axis=-1)
        ctx = (a @ v).transpose(0, 2, 1, 3).reshape(B, Sq, D)
        return ctx @ p["w_o"]

    xn = ln(x, params["ln"][0]["alpha"], params["ln"][0]["bias"])
    x = x + mha(xn, xn, xn, tgt_mask, params["self_attn"])
    xn = ln(x, params["ln"][1]["alpha"], params["ln"][1]["bias"])
    x = x + mha(xn, enc, enc, src_mask, params["cross_attn"])
    xn = ln(x, params["ln"][2]["alpha"], params["ln"][2]["bias"])
    ff = jnp.maximum(xn @ params["ffn"]["w1"] + params["ffn"]["b1"], 0.0)
    x = x + (ff @ params["ffn"]["w2"] + params["ffn"]["b2"])
    return x


if __name__ == "__main__":
    B, S, S_enc = 2, 8, 8
    d_model, h, d_ff = 32, 4, 64

    root = jax.random.PRNGKey(0)
    keys = jax.random.split(root, 20)
    w_scale = 0.05

    def w(k, shape):
        return w_scale * jax.random.normal(k, shape, dtype=jnp.float32)

    params = {
        "self_attn": {"w_q": w(keys[0], (d_model, d_model)),
                      "w_k": w(keys[1], (d_model, d_model)),
                      "w_v": w(keys[2], (d_model, d_model)),
                      "w_o": w(keys[3], (d_model, d_model))},
        "cross_attn": {"w_q": w(keys[4], (d_model, d_model)),
                       "w_k": w(keys[5], (d_model, d_model)),
                       "w_v": w(keys[6], (d_model, d_model)),
                       "w_o": w(keys[7], (d_model, d_model))},
        "ffn": {"w1": w(keys[8], (d_model, d_ff)),
                "b1": w(keys[9], (d_ff,)),
                "w2": w(keys[10], (d_ff, d_model)),
                "b2": w(keys[11], (d_model,))},
        "ln": [
            {"alpha": 1.0 + 0.1 * jax.random.normal(keys[12 + i], (d_model,),
                                                    dtype=jnp.float32),
             "bias": 0.1 * jax.random.normal(keys[15 + i], (d_model,),
                                             dtype=jnp.float32)}
            for i in range(3)
        ],
    }

    x = jax.random.normal(keys[18], (B, S, d_model), dtype=jnp.float32)
    enc = jax.random.normal(keys[19], (B, S_enc, d_model), dtype=jnp.float32)
    tgt_mask = jnp.broadcast_to(
        jnp.tril(jnp.ones((S, S), jnp.float32))[None, None], (B, 1, S, S))
    src_mask = jnp.ones((B, 1, S, S_enc), jnp.float32)

    out = decoder_block_forward(x, enc, src_mask, tgt_mask, params, h)
    out = jax.block_until_ready(out)
    assert out.shape == (B, S, d_model)

    ref = _reference_decoder_block(x, enc, src_mask, tgt_mask, params, h)
    max_err = float(jnp.max(jnp.abs(out - ref)))
    assert jnp.allclose(out, ref, atol=2e-2, rtol=2e-2), f"max_err={max_err}"

    print("KERNEL_OK")
</pallas_src>

<mosaic_0001>
module attributes {stable_mosaic.version = 11 : i64} {
  func.func @_layernorm_kernel(%arg0: i32, %arg1: memref<16x32xf32, #tpu.memory_space<vmem>>, %arg2: memref<1x32xf32, #tpu.memory_space<vmem>>, %arg3: memref<1x32xf32, #tpu.memory_space<vmem>>, %arg4: memref<16x32xf32, #tpu.memory_space<vmem>>) attributes {dimension_semantics = [#tpu.dimension_semantics<parallel>], iteration_bounds = array<i64: 1>, scalar_prefetch = 0 : i64, scratch_operands = 0 : i64, tpu.core_type = #tpu.core_type<tc>, window_params = [{transform_indices = @transform_0, window_bounds = array<i64: 16, 32>}, {pipeline_mode = #tpu.pipeline_mode<synchronous>, transform_indices = @transform_1, window_bounds = array<i64: 1, 32>}, {pipeline_mode = #tpu.pipeline_mode<synchronous>, transform_indices = @transform_2, window_bounds = array<i64: 1, 32>}, {transform_indices = @transform_3, window_bounds = array<i64: 16, 32>}]} {
    %c0 = arith.constant 0 : index
    %c0_0 = arith.constant 0 : index
    %0 = vector.load %arg1[%c0, %c0_0] : memref<16x32xf32, #tpu.memory_space<vmem>>, vector<16x32xf32>
    %cst = arith.constant dense<0.000000e+00> : vector<16xf32>
    %1 = vector.multi_reduction <add>, %0, %cst [1] : vector<16x32xf32> to vector<16xf32>
    %2 = vector.shape_cast %1 : vector<16xf32> to vector<16x1xf32>
    %cst_1 = arith.constant 3.200000e+01 : f32
    %3 = vector.broadcast %cst_1 : f32 to vector<16x1xf32>
    %4 = arith.divf %2, %3 : vector<16x1xf32>
    %5 = vector.broadcast %4 : vector<16x1xf32> to vector<16x32xf32>
    %6 = arith.subf %0, %5 : vector<16x32xf32>
    %7 = arith.mulf %6, %6 : vector<16x32xf32>
    %cst_2 = arith.constant dense<0.000000e+00> : vector<16xf32>
    %8 = vector.multi_reduction <add>, %7, %cst_2 [1] : vector<16x32xf32> to vector<16xf32>
    %9 = vector.shape_cast %8 : vector<16xf32> to vector<16x1xf32>
    %cst_3 = arith.constant 0.0322580636 : f32
    %10 = vector.broadcast %cst_3 : f32 to vector<16x1xf32>
    %11 = arith.mulf %9, %10 : vector<16x1xf32>
    %12 = math.sqrt %11 : vector<16x1xf32>
    %cst_4 = arith.constant 9.99999997E-7 : f32
    %13 = vector.broadcast %cst_4 : f32 to vector<16x1xf32>
    %14 = arith.addf %12, %13 : vector<16x1xf32>
    %15 = vector.broadcast %14 : vector<16x1xf32> to vector<16x32xf32>
    %16 = arith.divf %6, %15 : vector<16x32xf32>
    %c0_5 = arith.constant 0 : index
    %c0_6 = arith.constant 0 : index
    %17 = vector.load %arg2[%c0_5, %c0_6] : memref<1x32xf32, #tpu.memory_space<vmem>>, vector<1x32xf32>
    %18 = vector.broadcast %17 : vector<1x32xf32> to vector<16x32xf32>
    %19 = arith.mulf %18, %16 : vector<16x32xf32>
    %c0_7 = arith.constant 0 : index
    %c0_8 = arith.constant 0 : index
    %20 = vector.load %arg3[%c0_7, %c0_8] : memref<1x32xf32, #tpu.memory_space<vmem>>, vector<1x32xf32>
    %21 = vector.broadcast %20 : vector<1x32xf32> to vector<16x32xf32>
    %22 = arith.addf %19, %21 : vector<16x32xf32>
    %c0_9 = arith.constant 0 : index
    %c0_10 = arith.constant 0 : index
    %23 = vector.load %arg4[%c0_9, %c0_10] : memref<16x32xf32, #tpu.memory_space<vmem>>, vector<16x32xf32>
    tpu.vector_store %arg4[%c0_9, %c0_10], %22 {strides = array<i32>} : memref<16x32xf32, #tpu.memory_space<vmem>>, vector<16x32xf32>,
    return
  }
  func.func @transform_0(%arg0: i32) -> (i32, i32) {
    %c0_i32 = arith.constant 0 : i32
    %c0_i32_0 = arith.constant 0 : i32
    return %arg0, %c0_i32 : i32, i32
  }
  func.func @transform_1(%arg0: i32) -> (i32, i32) {
    %c0_i32 = arith.constant 0 : i32
    %c0_i32_0 = arith.constant 0 : i32
    %c0_i32_1 = arith.constant 0 : i32
    return %c0_i32, %c0_i32_0 : i32, i32
  }
  func.func @transform_2(%arg0: i32) -> (i32, i32) {
    %c0_i32 = arith.constant 0 : i32
    %c0_i32_0 = arith.constant 0 : i32
    %c0_i32_1 = arith.constant 0 : i32
    return %c0_i32, %c0_i32_0 : i32, i32
  }
  func.func @transform_3(%arg0: i32) -> (i32, i32) {
    %c0_i32 = arith.constant 0 : i32
    %c0_i32_0 = arith.constant 0 : i32
    return %arg0, %c0_i32 : i32, i32
  }
}

</mosaic_0001>

<llo_original>
// kernel: tpu_custom_call.1
$region0: #{tpu_custom_call.1}
  #allocation0 [shape = 'u32[]', space=smem, size = 0x4, offset = 0x4, fixed_abs, tag = 'smem constant byte address 0x4 - core index']
  #allocation1 [shape = 'u32[144,128]{1,0:T(1,128)}', space=vmem, size = 0x12000, scoped, tag = 'internal scratch']
  %s0 = inlined_call_operand.hbm [shape: f32[16,32], index: 0, kind: input, shape index: {}]
  %s1 = inlined_call_operand.vmem [shape: f32[1,32], index: 1, kind: input, shape index: {}]
  %s2 = inlined_call_operand.vmem [shape: f32[1,32], index: 2, kind: input, shape index: {}]
  %s3 = inlined_call_operand.hbm [shape: f32[16,32], index: 3, kind: output, shape index: {}]
  %s4 = sld [smem:[#allocation0]]
  $region26: #{tpu_custom_call.1} parent=0
    _
  %s6 = ssub.s32 1, %s4
  %s7 = scalar_select 0, %s6, %s4
  $region1: #{tpu_custom_call.1} parent=0
    #allocation2 [shape = 'u8[8192]{0}', space=vmem, size = 0x2000, scoped, tag = 'input window, operand 0, single buffered']
    #allocation3 [shape = 's32[1]{0}', space=sflag, size = 0x4, scoped, tag = 'scoped memory for tpu_custom_call.1']
    #allocation4 [shape = 's32[1]{0}', space=sflag, size = 0x4, scoped, tag = 'scoped memory for tpu_custom_call.1']
    #allocation5 [shape = 'u8[8192]{0}', space=vmem, size = 0x2000, scoped, tag = 'output window, operand 0, single buffered']
    %8 = vsyncpa [#allocation3], 0
    %9 = vsyncpa [#allocation4], 0
    // Predicated region
    $region2: #{tpu_custom_call.1} parent=1 // pred_check
      _
    $region3: #{tpu_custom_call.1} parent=1 // pred_check_branch
      %11 = sbr.rel (0) target = $region5
    $region4: #{tpu_custom_call.1} parent=1 // pred_region
      %s13 = ssub.s32 256, 256
      %14 = vsyncadd [#allocation3], %s13
      %s15 = sshll.u32 [#allocation2], 4
      %s16 = int_to_ptr.vmem [resolvable:$true] %s15
      %21 = dma.hbm_to_vmem [thread:$0]  %s0, 256, %s16, [#allocation3], 128, 128, 8
    $region5: #{tpu_custom_call.1} parent=1 // pred_fallthru
      _
    // Predicated region
    $region6: #{tpu_custom_call.1} parent=1 // pred_check
      _
    $region7: #{tpu_custom_call.1} parent=1 // pred_check_branch
      %23 = sbr.rel (0) target = $region9
    $region8: #{tpu_custom_call.1} parent=1 // pred_region
      _
    $region9: #{tpu_custom_call.1} parent=1 // pred_fallthru
      _
    // Predicated region
    $region10: #{tpu_custom_call.1} parent=1 // pred_check
      _
    $region11: #{tpu_custom_call.1} parent=1 // pred_check_branch
      %25 = sbr.rel (0) target = $region13
    $region12: #{tpu_custom_call.1} parent=1 // pred_region
      _
    $region13: #{tpu_custom_call.1} parent=1 // pred_fallthru
      _
    // Predicated region
    $region14: #{tpu_custom_call.1} parent=1 // pred_check
      _
    $region15: #{tpu_custom_call.1} parent=1 // pred_check_branch
      %27 = sbr.rel (0) target = $region17
    $region16: #{tpu_custom_call.1} parent=1 // pred_region
      %28 = dma.done [#allocation3], 256
    $region17: #{tpu_custom_call.1} parent=1 // pred_fallthru
      _
    %v29 = vld [vmem:[#allocation2] sm:$0xff]
    %v30 = vld [vmem:[#allocation2 + $0x8] sm:$0xff]
    %vm31 = vcmask 261120
    %v32 = vsel %vm31, %v29, 0.0
    %33 = vadd.xlane.f32.xlu0 %v32
    %v34 = vpop.xlane.xlu0 %33
    %v35 = vsel %vm31, %v30, 0.0
    %36 = vadd.xlane.f32.xlu0 %v35
    %v37 = vpop.xlane.xlu0 %36
    %v38 = vrcp.pop 32.0
    %v39 = vmul.f32 %v34, %v38
    %v40 = vmul.f32 %v37, %v38
    %v41 = vsub.f32 %v29, %v39
    %v42 = vsub.f32 %v30, %v40
    %v43 = vmul.f32 %v41, %v41
    %v44 = vmul.f32 %v42, %v42
    %v45 = vsel %vm31, %v43, 0.0
    %46 = vadd.xlane.f32.xlu0 %v45
    %v47 = vpop.xlane.xlu0 %46
    %v48 = vsel %vm31, %v44, 0.0
    %49 = vadd.xlane.f32.xlu0 %v48
    %v50 = vpop.xlane.xlu0 %49
    %v51 = vmul.f32 %v47, 0.032258064
    %v52 = vmul.f32 %v50, 0.032258064
    %v53 = vrsqrt.pop %v51
    %v54 = vmul.f32 %v51, %v53
    %vm55 = vcmp.eq.f32.partialorder %v51, inf
    %v56 = vsel %vm55, %v51, %v54
    %vm57 = vcmp.eq.f32.partialorder %v51, 0.0
    %v58 = vand.u32 %v51, 2147483648
    %v59 = vsel %vm57, %v58, %v56
    %v60 = vrsqrt.pop %v52
    %v61 = vmul.f32 %v52, %v60
    %vm62 = vcmp.eq.f32.partialorder %v52, inf
    %v63 = vsel %vm62, %v52, %v61
    %vm64 = vcmp.eq.f32.partialorder %v52, 0.0
    %v65 = vand.u32 %v52, 2147483648
    %v66 = vsel %vm64, %v65, %v63
    %v67 = vadd.f32 %v59, 1e-06
    %v68 = vadd.f32 %v66, 1e-06
    %v69 = vrcp.pop %v67
    %v70 = vmul.f32 %v41, %v69
    %v71 = vrcp.pop %v68
    %v72 = vmul.f32 %v42, %v71
    %v73 = vld [vmem:[%s1] sm:$0x1]
    %v75 = vlaneseq
    %v76 = vshrl.u32 %v75, 7
    %v77 = vsub.s32 0, %v76
    %v78 = vrot.slane %v73, %v77
    %v80 = vmul.f32 %v78, %v70
    %v81 = vmul.f32 %v78, %v72
    %v82 = vld [vmem:[%s2] sm:$0x1]
    %v84 = vlaneseq
    %v85 = vshrl.u32 %v84, 7
    %v86 = vsub.s32 0, %v85
    %v87 = vrot.slane %v82, %v86
    %v89 = vadd.f32 %v80, %v87
    %v90 = vadd.f32 %v81, %v87
    %91 = vst.msk [vmem:[#allocation5] sm:$0xff] %vm31, %v89
    %92 = vst.msk [vmem:[#allocation5 + $0x8] sm:$0xff] %vm31, %v90
    // Predicated region
    $region18: #{tpu_custom_call.1} parent=1 // pred_check
      _
    $region19: #{tpu_custom_call.1} parent=1 // pred_check_branch
      %94 = sbr.rel (0) target = $region21
    $region20: #{tpu_custom_call.1} parent=1 // pred_region
      %s96 = ssub.s32 256, 256
      %97 = vsyncadd [#allocation4], %s96
      %s98 = sshll.u32 [#allocation5], 4
      %s99 = int_to_ptr.vmem [resolvable:$true] %s98
      %104 = dma.vmem_to_hbm [thread:$0]  %s99, 256, %s3, [#allocation4], 128, 128, 8
    $region21: #{tpu_custom_call.1} parent=1 // pred_fallthru
      _
    // Predicated region
    $region22: #{tpu_custom_call.1} parent=1 // pred_check
      _
    $region23: #{tpu_custom_call.1} parent=1 // pred_check_branch
      %106 = sbr.rel (0) target = $region25
    $region24: #{tpu_custom_call.1} parent=1 // pred_region
      %107 = dma.done [#allocation4], 256
    $region25: #{tpu_custom_call.1} parent=1 // pred_fallthru
      _
    %108 = vsyncpa [#allocation3], 1
    %109 = vsyncpa [#allocation4], 1

</llo_original>
